<compile_context>
chip_gen: v5e
topology: v5e:2x2
jax: 0.10.0
libtpu: 0.0.40
codegen_flags: <defaults>
</compile_context>

<pallas_src>
import functools
import math

import jax
import jax.numpy as jnp
from jax import lax
from jax.experimental import pallas as pl
from jax.experimental.pallas import tpu as pltpu

MAX_DURATION = 6.0
MAX_LOG_DUR = math.log1p(MAX_DURATION)   # torch.log1p(max_duration)
ALPHA = 1.0
LN_EPS = 1e-5                            # torch LayerNorm default eps

T_BUCKET = 256   # bucket expand_max_len -> avoids per-shape Mosaic recompiles
T_TILE = 256     # output-time tile for the LR kernel (VMEM-safe on v7x)


# --------------------------------------------------------------------------
# Kernel 1: duration predictor (bblk batches per grid step, rows = bblk*Lp)
# --------------------------------------------------------------------------
def _predictor_kernel(x_ref, w1_ref, b1_ref, g1_ref, be1_ref,
                      w2_ref, b2_ref, g2_ref, be2_ref,
                      wl_ref, bl_ref, dur_ref, *, bblk, Lp, L_real, F_):
    rows = bblk * Lp
    x = x_ref[...]                                          # [rows, D] f32

    # Sequence-boundary masks over the merged (batch*seq) row axis.  Built from
    # a plain row iota + a trace-time-unrolled OR over the bblk sequence starts
    # (no vector int division / modulo, no reshapes).
    r = lax.broadcasted_iota(jnp.int32, (rows, 1), 0)
    starts = [k * Lp for k in range(bblk)]
    is_first = functools.reduce(jnp.logical_or, [r == s for s in starts])
    is_last = functools.reduce(jnp.logical_or, [r == s + Lp - 1 for s in starts])
    not_first = jnp.logical_not(is_first)
    not_last = jnp.logical_not(is_last)
    mask_pad = None
    if Lp != L_real:
        # rows belonging to real (unpadded) sequence positions
        mask_pad = functools.reduce(
            jnp.logical_or, [(r >= s) & (r < s + L_real) for s in starts])

    def conv_ln_relu(h, wcat_ref, b_ref, g_ref, beta_ref):
        # Conv1d(k=3, padding=1): all 3 taps in a single MXU pass.
        y = jnp.dot(h, wcat_ref[...], preferred_element_type=jnp.float32)  # [rows, 3F]
        y0 = y[:, 0 * F_:1 * F_]          # tap for h[t-1]
        y1 = y[:, 1 * F_:2 * F_]          # tap for h[t]
        y2 = y[:, 2 * F_:3 * F_]          # tap for h[t+1]
        # shift along rows with non-negative roll amounts; mask the wrap-around
        # and cross-sequence leakage at batch boundaries.
        y0s = jnp.where(not_first, pltpu.roll(y0, shift=1, axis=0), 0.0)
        y2s = jnp.where(not_last, pltpu.roll(y2, shift=rows - 1, axis=0), 0.0)
        z = y0s + y1 + y2s + b_ref[...]
        # LayerNorm over the filter (lane) dim.
        mu = jnp.mean(z, axis=-1, keepdims=True)
        var = jnp.mean((z - mu) ** 2, axis=-1, keepdims=True)
        z = (z - mu) * lax.rsqrt(var + LN_EPS)
        z = z * g_ref[...] + beta_ref[...]
        z = jnp.maximum(z, 0.0)           # ReLU (dropout omitted, see TODO)
        if mask_pad is not None:
            # zero padded tail rows so layer-2's conv sees proper zero padding
            z = jnp.where(mask_pad, z, 0.0)
        return z

    h = conv_ln_relu(x, w1_ref, b1_ref, g1_ref, be1_ref)
    h = conv_ln_relu(h, w2_ref, b2_ref, g2_ref, be2_ref)

    # Linear(F, 1) with the (1, F) weight on the LHS and the contraction on the
    # last dim of both operands -> result is lane-dense (1, rows); no [rows, 1]
    # masked store.
    s = lax.dot_general(wl_ref[...], h, (((1,), (1,)), ((), ())),
                        preferred_element_type=jnp.float32) + bl_ref[...]   # (1, rows)
    # ((exp(out * max_log_duration) - 1) * alpha + 0.5).int()
    dur = ((jnp.exp(s * MAX_LOG_DUR) - 1.0) * ALPHA + 0.5).astype(jnp.int32)
    dur_ref[0] = dur                      # (1, rows), lane-dense


def _pick_bblk(B, Lp, target_rows=256, min_steps=2):
    """Batches per grid step: fill sublanes but keep >=2 steps for megacore."""
    bblk = max(1, min(B, max(1, target_rows // Lp)))
    if B >= min_steps:
        bblk = min(bblk, max(1, B // min_steps))
    return bblk


def duration_predictor(x, params):
    B, L, D = x.shape
    F_ = params["b1"].shape[-1]
    Lp = ((L + 7) // 8) * 8               # sublane-align the sequence length
    bblk = _pick_bblk(B, Lp)
    nb = -(-B // bblk)
    Bp = nb * bblk
    rows = bblk * Lp

    xp = x.astype(jnp.float32)
    if (Bp, Lp) != (B, L):
        xp = jnp.pad(xp, ((0, Bp - B), (0, Lp - L), (0, 0)))
    x2 = xp.reshape(Bp * Lp, D)           # merge batch into the sublane axis

    kernel = functools.partial(_predictor_kernel,
                               bblk=bblk, Lp=Lp, L_real=L, F_=F_)

    def full2(a):                         # whole-array (2-D) block, reused each step
        return pl.BlockSpec(a.shape, lambda i: (0, 0))

    w1, b1, g1, be1 = params["w1_cat"], params["b1"], params["g1"], params["be1"]
    w2, b2, g2, be2 = params["w2_cat"], params["b2"], params["g2"], params["be2"]
    wl, bl = params["wl"], params["bl"]

    dur3 = pl.pallas_call(
        kernel,
        out_shape=jax.ShapeDtypeStruct((nb, 1, rows), jnp.int32),
        grid_spec=pltpu.PrefetchScalarGridSpec(
            num_scalar_prefetch=0,
            grid=(nb,),
            in_specs=[
                pl.BlockSpec((rows, D), lambda i: (i, 0)),
                full2(w1), full2(b1), full2(g1), full2(be1),
                full2(w2), full2(b2), full2(g2), full2(be2),
                full2(wl), full2(bl),
            ],
            out_specs=pl.BlockSpec((1, 1, rows), lambda i: (i, 0, 0)),
        ),
        compiler_params=pltpu.CompilerParams(dimension_semantics=("parallel",)),
    )(x2, w1, b1, g1, be1, w2, b2, g2, be2, wl, bl)

    return dur3.reshape(Bp, Lp)[:B, :L]   # (B, L) int32


# --------------------------------------------------------------------------
# Kernel 2: length regulation (alignment build per T-tile + alignment @ x)
# --------------------------------------------------------------------------
def _lr_kernel(ce_ref, ci_ref, x_ref, out_ref, *, tT, Lp):
    lo = ce_ref[0]                                        # (1, Lp) int32, exclusive cumsum
    hi = ci_ref[0]                                        # (1, Lp) int32, inclusive cumsum
    t0 = pl.program_id(1) * tT
    t_idx = t0 + lax.broadcasted_iota(jnp.int32, (tT, Lp), 0)
    xb = x_ref[0]                                         # (Lp, D)
    # alignment[t, j] = 1  iff  cum_excl[j] <= t < cum_incl[j]
    # int32 compares with implicit broadcasting (no materialized broadcast_to).
    # The cast matches x's dtype, so a bf16 model gets the bf16 MXU path.
    align = ((t_idx >= lo) & (t_idx < hi)).astype(xb.dtype)       # (tT, Lp)
    out_ref[0] = jnp.dot(align, xb,
                         preferred_element_type=jnp.float32).astype(xb.dtype)


def length_regulate(x, cum_excl, cum_incl, T_pad, tT=T_TILE):
    B, L, D = x.shape
    Lp = ((L + 7) // 8) * 8
    xf = x
    ce = cum_excl.astype(jnp.int32)
    ci = cum_incl.astype(jnp.int32)
    if Lp != L:
        xf = jnp.pad(xf, ((0, 0), (0, Lp - L), (0, 0)))
        # padded positions: lo == hi == 0 -> empty interval -> no contribution
        ce = jnp.pad(ce, ((0, 0), (0, Lp - L)))
        ci = jnp.pad(ci, ((0, 0), (0, Lp - L)))
    ce3 = ce.reshape(B, 1, Lp)
    ci3 = ci.reshape(B, 1, Lp)

    tT = min(tT, T_pad)
    assert T_pad % tT == 0
    nT = T_pad // tT
    kernel = functools.partial(_lr_kernel, tT=tT, Lp=Lp)

    return pl.pallas_call(
        kernel,
        out_shape=jax.ShapeDtypeStruct((B, T_pad, D), x.dtype),
        grid_spec=pltpu.PrefetchScalarGridSpec(
            num_scalar_prefetch=0,
            grid=(B, nT),
            in_specs=[
                pl.BlockSpec((1, 1, Lp), lambda b, t: (b, 0, 0)),
                pl.BlockSpec((1, 1, Lp), lambda b, t: (b, 0, 0)),
                pl.BlockSpec((1, Lp, D), lambda b, t: (b, 0, 0)),
            ],
            out_specs=pl.BlockSpec((1, tT, D), lambda b, t: (b, t, 0)),
        ),
        compiler_params=pltpu.CompilerParams(
            dimension_semantics=("parallel", "parallel")),
    )(ce3, ci3, xf)


# --------------------------------------------------------------------------
# Full LengthRegulator.forward (inference branch: target=None, alpha=1.0)
# --------------------------------------------------------------------------
def length_regulator_forward(x, params):
    B, L, D = x.shape
    dur = duration_predictor(x, params)                   # (B, L) int32
    # duration cumsums in plain XLA (tiny); avoids an LxL matmul in-kernel.
    cum_incl = jnp.cumsum(dur, axis=-1)
    cum_excl = cum_incl - dur
    # expand_max_len = max(sum(durations)) -- data dependent, resolved on host
    T = int(jnp.max(cum_incl[:, -1]))
    T = max(T, 1)
    T_pad = -(-T // T_BUCKET) * T_BUCKET                  # bucket -> stable kernel shapes
    out_pad = length_regulate(x, cum_excl, cum_incl, T_pad)  # (B, T_pad, D)
    out = out_pad[:, :T, :]
    mel_pos = jnp.arange(1, T + 1, dtype=jnp.int32)[None, :]
    return out, mel_pos, dur


if __name__ == "__main__":
    B, L, D, F_ = 4, 8, 32, 32          # batch, seq, encoder_dim, filter_size
    key = jax.random.PRNGKey(0)
    ks = jax.random.split(key, 4)
    x = jax.random.normal(ks[0], (B, L, D), jnp.float32)

    # conv weights: torch Conv1d weight [out, in, 3] viewed tap-major [3, in, out]
    # and concatenated into [in, 3*out] so each layer is one MXU pass.
    w1_taps = jax.random.normal(ks[1], (3, D, F_), jnp.float32) * 0.1
    w2_taps = jax.random.normal(ks[2], (3, F_, F_), jnp.float32) * 0.1
    params = dict(
        w1_cat=jnp.transpose(w1_taps, (1, 0, 2)).reshape(D, 3 * F_),
        b1=jnp.zeros((1, F_), jnp.float32),
        g1=jnp.ones((1, F_), jnp.float32),
        be1=jnp.zeros((1, F_), jnp.float32),
        w2_cat=jnp.transpose(w2_taps, (1, 0, 2)).reshape(F_, 3 * F_),
        b2=jnp.zeros((1, F_), jnp.float32),
        g2=jnp.ones((1, F_), jnp.float32),
        be2=jnp.zeros((1, F_), jnp.float32),
        # linear: torch Linear(F, 1).weight is [1, F] -- used as-is
        wl=jax.random.normal(ks[3], (1, F_), jnp.float32) * 0.2,
        bl=jnp.full((1, 1), 0.6, jnp.float32),  # positive bias -> nonzero durations
    )

    out, mel_pos, dur = length_regulator_forward(x, params)
    out = jax.block_until_ready(out)
    mel_pos = jax.block_until_ready(mel_pos)

    assert out.ndim == 3 and out.shape[0] == B and out.shape[2] == D
    assert mel_pos.shape == (1, out.shape[1])
    assert dur.shape == (B, L) and bool(jnp.all(dur >= 0))
    assert bool(jnp.all(jnp.isfinite(out)))
    print("KERNEL_OK")
</pallas_src>

<mosaic_0001>
module attributes {stable_mosaic.version = 11 : i64} {
  func.func @_predictor_kernel(%arg0: i32, %arg1: memref<16x32xf32, #tpu.memory_space<vmem>>, %arg2: memref<32x96xf32, #tpu.memory_space<vmem>>, %arg3: memref<1x32xf32, #tpu.memory_space<vmem>>, %arg4: memref<1x32xf32, #tpu.memory_space<vmem>>, %arg5: memref<1x32xf32, #tpu.memory_space<vmem>>, %arg6: memref<32x96xf32, #tpu.memory_space<vmem>>, %arg7: memref<1x32xf32, #tpu.memory_space<vmem>>, %arg8: memref<1x32xf32, #tpu.memory_space<vmem>>, %arg9: memref<1x32xf32, #tpu.memory_space<vmem>>, %arg10: memref<1x32xf32, #tpu.memory_space<vmem>>, %arg11: memref<1x1xf32, #tpu.memory_space<vmem>>, %arg12: memref<1x1x16xi32, #tpu.memory_space<vmem>>) attributes {dimension_semantics = [#tpu.dimension_semantics<parallel>], iteration_bounds = array<i64: 2>, scalar_prefetch = 0 : i64, scratch_operands = 0 : i64, tpu.core_type = #tpu.core_type<tc>, window_params = [{transform_indices = @transform_0, window_bounds = array<i64: 16, 32>}, {pipeline_mode = #tpu.pipeline_mode<synchronous>, transform_indices = @transform_1, window_bounds = array<i64: 32, 96>}, {pipeline_mode = #tpu.pipeline_mode<synchronous>, transform_indices = @transform_2, window_bounds = array<i64: 1, 32>}, {pipeline_mode = #tpu.pipeline_mode<synchronous>, transform_indices = @transform_3, window_bounds = array<i64: 1, 32>}, {pipeline_mode = #tpu.pipeline_mode<synchronous>, transform_indices = @transform_4, window_bounds = array<i64: 1, 32>}, {pipeline_mode = #tpu.pipeline_mode<synchronous>, transform_indices = @transform_5, window_bounds = array<i64: 32, 96>}, {pipeline_mode = #tpu.pipeline_mode<synchronous>, transform_indices = @transform_6, window_bounds = array<i64: 1, 32>}, {pipeline_mode = #tpu.pipeline_mode<synchronous>, transform_indices = @transform_7, window_bounds = array<i64: 1, 32>}, {pipeline_mode = #tpu.pipeline_mode<synchronous>, transform_indices = @transform_8, window_bounds = array<i64: 1, 32>}, {pipeline_mode = #tpu.pipeline_mode<synchronous>, transform_indices = @transform_9, window_bounds = array<i64: 1, 32>}, {pipeline_mode = #tpu.pipeline_mode<synchronous>, transform_indices = @transform_10, window_bounds = array<i64: 1, 1>}, {transform_indices = @transform_11, window_bounds = array<i64: 1, 1, 16>}]} {
    %c0 = arith.constant 0 : index
    %c0_0 = arith.constant 0 : index
    %0 = vector.load %arg1[%c0, %c0_0] : memref<16x32xf32, #tpu.memory_space<vmem>>, vector<16x32xf32>
    %1 = tpu.iota {dimensions = array<i32: 0>} : vector<16x1xi32>
    %c0_i32 = arith.constant 0 : i32
    %2 = vector.broadcast %c0_i32 : i32 to vector<16x1xi32>
    %3 = arith.cmpi eq, %1, %2 : vector<16x1xi32>
    %c8_i32 = arith.constant 8 : i32
    %4 = vector.broadcast %c8_i32 : i32 to vector<16x1xi32>
    %5 = arith.cmpi eq, %1, %4 : vector<16x1xi32>
    %6 = arith.ori %3, %5 : vector<16x1xi1>
    %c7_i32 = arith.constant 7 : i32
    %7 = vector.broadcast %c7_i32 : i32 to vector<16x1xi32>
    %8 = arith.cmpi eq, %1, %7 : vector<16x1xi32>
    %c15_i32 = arith.constant 15 : i32
    %9 = vector.broadcast %c15_i32 : i32 to vector<16x1xi32>
    %10 = arith.cmpi eq, %1, %9 : vector<16x1xi32>
    %11 = arith.ori %8, %10 : vector<16x1xi1>
    %cst = arith.constant dense<true> : vector<16x1xi1>
    %12 = arith.xori %6, %cst : vector<16x1xi1>
    %cst_1 = arith.constant dense<true> : vector<16x1xi1>
    %13 = arith.xori %11, %cst_1 : vector<16x1xi1>
    %c0_2 = arith.constant 0 : index
    %c0_3 = arith.constant 0 : index
    %14 = vector.load %arg2[%c0_2, %c0_3] : memref<32x96xf32, #tpu.memory_space<vmem>>, vector<32x96xf32>
    %cst_4 = arith.constant dense<0.000000e+00> : vector<16x96xf32>
    %15 = tpu.matmul %0, %14, %cst_4 {dimension_numbers = #tpu.dot_dimension_numbers<[1], [0], [0], [1], [0, 0, 1, 1], [], []>} : vector<16x32xf32>, vector<32x96xf32>, vector<16x96xf32> -> vector<16x96xf32>
    %16 = vector.extract_strided_slice %15 {offsets = [0, 0], sizes = [16, 32], strides = [1, 1]} : vector<16x96xf32> to vector<16x32xf32>
    %17 = vector.extract_strided_slice %15 {offsets = [0, 32], sizes = [16, 32], strides = [1, 1]} : vector<16x96xf32> to vector<16x32xf32>
    %18 = vector.extract_strided_slice %15 {offsets = [0, 64], sizes = [16, 32], strides = [1, 1]} : vector<16x96xf32> to vector<16x32xf32>
    %c1_i32 = arith.constant 1 : i32
    %19 = tpu.dynamic_rotate %16 by %c1_i32 dim 0 : vector<16x32xf32>, i32 -> vector<16x32xf32>
    %cst_5 = arith.constant 0.000000e+00 : f32
    %20 = vector.shape_cast %12 : vector<16x1xi1> to vector<16x1xi1>
    %21 = vector.broadcast %20 : vector<16x1xi1> to vector<16x32xi1>
    %22 = vector.broadcast %cst_5 : f32 to vector<16x32xf32>
    %23 = arith.select %21, %19, %22 : vector<16x32xi1>, vector<16x32xf32>
    %c15_i32_6 = arith.constant 15 : i32
    %24 = tpu.dynamic_rotate %18 by %c15_i32_6 dim 0 : vector<16x32xf32>, i32 -> vector<16x32xf32>
    %cst_7 = arith.constant 0.000000e+00 : f32
    %25 = vector.shape_cast %13 : vector<16x1xi1> to vector<16x1xi1>
    %26 = vector.broadcast %25 : vector<16x1xi1> to vector<16x32xi1>
    %27 = vector.broadcast %cst_7 : f32 to vector<16x32xf32>
    %28 = arith.select %26, %24, %27 : vector<16x32xi1>, vector<16x32xf32>
    %29 = arith.addf %23, %17 : vector<16x32xf32>
    %30 = arith.addf %29, %28 : vector<16x32xf32>
    %c0_8 = arith.constant 0 : index
    %c0_9 = arith.constant 0 : index
    %31 = vector.load %arg3[%c0_8, %c0_9] : memref<1x32xf32, #tpu.memory_space<vmem>>, vector<1x32xf32>
    %32 = vector.broadcast %31 : vector<1x32xf32> to vector<16x32xf32>
    %33 = arith.addf %30, %32 : vector<16x32xf32>
    %cst_10 = arith.constant dense<0.000000e+00> : vector<16xf32>
    %34 = vector.multi_reduction <add>, %33, %cst_10 [1] : vector<16x32xf32> to vector<16xf32>
    %35 = vector.shape_cast %34 : vector<16xf32> to vector<16x1xf32>
    %cst_11 = arith.constant 3.200000e+01 : f32
    %36 = vector.broadcast %cst_11 : f32 to vector<16x1xf32>
    %37 = arith.divf %35, %36 : vector<16x1xf32>
    %38 = vector.broadcast %37 : vector<16x1xf32> to vector<16x32xf32>
    %39 = arith.subf %33, %38 : vector<16x32xf32>
    %40 = arith.mulf %39, %39 : vector<16x32xf32>
    %cst_12 = arith.constant dense<0.000000e+00> : vector<16xf32>
    %41 = vector.multi_reduction <add>, %40, %cst_12 [1] : vector<16x32xf32> to vector<16xf32>
    %42 = vector.shape_cast %41 : vector<16xf32> to vector<16x1xf32>
    %cst_13 = arith.constant 3.200000e+01 : f32
    %43 = vector.broadcast %cst_13 : f32 to vector<16x1xf32>
    %44 = arith.divf %42, %43 : vector<16x1xf32>
    %45 = vector.broadcast %37 : vector<16x1xf32> to vector<16x32xf32>
    %46 = arith.subf %33, %45 : vector<16x32xf32>
    %cst_14 = arith.constant 9.99999974E-6 : f32
    %47 = vector.broadcast %cst_14 : f32 to vector<16x1xf32>
    %48 = arith.addf %44, %47 : vector<16x1xf32>
    %49 = math.rsqrt %48 : vector<16x1xf32>
    %50 = vector.broadcast %49 : vector<16x1xf32> to vector<16x32xf32>
    %51 = arith.mulf %46, %50 : vector<16x32xf32>
    %c0_15 = arith.constant 0 : index
    %c0_16 = arith.constant 0 : index
    %52 = vector.load %arg4[%c0_15, %c0_16] : memref<1x32xf32, #tpu.memory_space<vmem>>, vector<1x32xf32>
    %53 = vector.broadcast %52 : vector<1x32xf32> to vector<16x32xf32>
    %54 = arith.mulf %51, %53 : vector<16x32xf32>
    %c0_17 = arith.constant 0 : index
    %c0_18 = arith.constant 0 : index
    %55 = vector.load %arg5[%c0_17, %c0_18] : memref<1x32xf32, #tpu.memory_space<vmem>>, vector<1x32xf32>
    %56 = vector.broadcast %55 : vector<1x32xf32> to vector<16x32xf32>
    %57 = arith.addf %54, %56 : vector<16x32xf32>
    %cst_19 = arith.constant 0.000000e+00 : f32
    %58 = vector.broadcast %cst_19 : f32 to vector<16x32xf32>
    %59 = arith.maximumf %57, %58 : vector<16x32xf32>
    %c0_20 = arith.constant 0 : index
    %c0_21 = arith.constant 0 : index
    %60 = vector.load %arg6[%c0_20, %c0_21] : memref<32x96xf32, #tpu.memory_space<vmem>>, vector<32x96xf32>
    %cst_22 = arith.constant dense<0.000000e+00> : vector<16x96xf32>
    %61 = tpu.matmul %59, %60, %cst_22 {dimension_numbers = #tpu.dot_dimension_numbers<[1], [0], [0], [1], [0, 0, 1, 1], [], []>} : vector<16x32xf32>, vector<32x96xf32>, vector<16x96xf32> -> vector<16x96xf32>
    %62 = vector.extract_strided_slice %61 {offsets = [0, 0], sizes = [16, 32], strides = [1, 1]} : vector<16x96xf32> to vector<16x32xf32>
    %63 = vector.extract_strided_slice %61 {offsets = [0, 32], sizes = [16, 32], strides = [1, 1]} : vector<16x96xf32> to vector<16x32xf32>
    %64 = vector.extract_strided_slice %61 {offsets = [0, 64], sizes = [16, 32], strides = [1, 1]} : vector<16x96xf32> to vector<16x32xf32>
    %c1_i32_23 = arith.constant 1 : i32
    %65 = tpu.dynamic_rotate %62 by %c1_i32_23 dim 0 : vector<16x32xf32>, i32 -> vector<16x32xf32>
    %cst_24 = arith.constant 0.000000e+00 : f32
    %66 = vector.shape_cast %12 : vector<16x1xi1> to vector<16x1xi1>
    %67 = vector.broadcast %66 : vector<16x1xi1> to vector<16x32xi1>
    %68 = vector.broadcast %cst_24 : f32 to vector<16x32xf32>
    %69 = arith.select %67, %65, %68 : vector<16x32xi1>, vector<16x32xf32>
    %c15_i32_25 = arith.constant 15 : i32
    %70 = tpu.dynamic_rotate %64 by %c15_i32_25 dim 0 : vector<16x32xf32>, i32 -> vector<16x32xf32>
    %cst_26 = arith.constant 0.000000e+00 : f32
    %71 = vector.shape_cast %13 : vector<16x1xi1> to vector<16x1xi1>
    %72 = vector.broadcast %71 : vector<16x1xi1> to vector<16x32xi1>
    %73 = vector.broadcast %cst_26 : f32 to vector<16x32xf32>
    %74 = arith.select %72, %70, %73 : vector<16x32xi1>, vector<16x32xf32>
    %75 = arith.addf %69, %63 : vector<16x32xf32>
    %76 = arith.addf %75, %74 : vector<16x32xf32>
    %c0_27 = arith.constant 0 : index
    %c0_28 = arith.constant 0 : index
    %77 = vector.load %arg7[%c0_27, %c0_28] : memref<1x32xf32, #tpu.memory_space<vmem>>, vector<1x32xf32>
    %78 = vector.broadcast %77 : vector<1x32xf32> to vector<16x32xf32>
    %79 = arith.addf %76, %78 : vector<16x32xf32>
    %cst_29 = arith.constant dense<0.000000e+00> : vector<16xf32>
    %80 = vector.multi_reduction <add>, %79, %cst_29 [1] : vector<16x32xf32> to vector<16xf32>
    %81 = vector.shape_cast %80 : vector<16xf32> to vector<16x1xf32>
    %cst_30 = arith.constant 3.200000e+01 : f32
    %82 = vector.broadcast %cst_30 : f32 to vector<16x1xf32>
    %83 = arith.divf %81, %82 : vector<16x1xf32>
    %84 = vector.broadcast %83 : vector<16x1xf32> to vector<16x32xf32>
    %85 = arith.subf %79, %84 : vector<16x32xf32>
    %86 = arith.mulf %85, %85 : vector<16x32xf32>
    %cst_31 = arith.constant dense<0.000000e+00> : vector<16xf32>
    %87 = vector.multi_reduction <add>, %86, %cst_31 [1] : vector<16x32xf32> to vector<16xf32>
    %88 = vector.shape_cast %87 : vector<16xf32> to vector<16x1xf32>
    %cst_32 = arith.constant 3.200000e+01 : f32
    %89 = vector.broadcast %cst_32 : f32 to vector<16x1xf32>
    %90 = arith.divf %88, %89 : vector<16x1xf32>
    %91 = vector.broadcast %83 : vector<16x1xf32> to vector<16x32xf32>
    %92 = arith.subf %79, %91 : vector<16x32xf32>
    %cst_33 = arith.constant 9.99999974E-6 : f32
    %93 = vector.broadcast %cst_33 : f32 to vector<16x1xf32>
    %94 = arith.addf %90, %93 : vector<16x1xf32>
    %95 = math.rsqrt %94 : vector<16x1xf32>
    %96 = vector.broadcast %95 : vector<16x1xf32> to vector<16x32xf32>
    %97 = arith.mulf %92, %96 : vector<16x32xf32>
    %c0_34 = arith.constant 0 : index
    %c0_35 = arith.constant 0 : index
    %98 = vector.load %arg8[%c0_34, %c0_35] : memref<1x32xf32, #tpu.memory_space<vmem>>, vector<1x32xf32>
    %99 = vector.broadcast %98 : vector<1x32xf32> to vector<16x32xf32>
    %100 = arith.mulf %97, %99 : vector<16x32xf32>
    %c0_36 = arith.constant 0 : index
    %c0_37 = arith.constant 0 : index
    %101 = vector.load %arg9[%c0_36, %c0_37] : memref<1x32xf32, #tpu.memory_space<vmem>>, vector<1x32xf32>
    %102 = vector.broadcast %101 : vector<1x32xf32> to vector<16x32xf32>
    %103 = arith.addf %100, %102 : vector<16x32xf32>
    %cst_38 = arith.constant 0.000000e+00 : f32
    %104 = vector.broadcast %cst_38 : f32 to vector<16x32xf32>
    %105 = arith.maximumf %103, %104 : vector<16x32xf32>
    %c0_39 = arith.constant 0 : index
    %c0_40 = arith.constant 0 : index
    %106 = vector.load %arg10[%c0_39, %c0_40] : memref<1x32xf32, #tpu.memory_space<vmem>>, vector<1x32xf32>
    %cst_41 = arith.constant dense<0.000000e+00> : vector<1x16xf32>
    %107 = tpu.matmul %106, %105, %cst_41 {dimension_numbers = #tpu.dot_dimension_numbers<[1], [1], [0], [0], [0, 0, 1, 0], [], []>} : vector<1x32xf32>, vector<16x32xf32>, vector<1x16xf32> -> vector<1x16xf32>
    %c0_42 = arith.constant 0 : index
    %c0_43 = arith.constant 0 : index
    %108 = vector.load %arg11[%c0_42, %c0_43] : memref<1x1xf32, #tpu.memory_space<vmem>>, vector<1x1xf32>
    %109 = vector.broadcast %108 : vector<1x1xf32> to vector<1x16xf32>
    %110 = arith.addf %107, %109 : vector<1x16xf32>
    %cst_44 = arith.constant 1.9459101 : f32
    %111 = vector.broadcast %cst_44 : f32 to vector<1x16xf32>
    %112 = arith.mulf %110, %111 : vector<1x16xf32>
    %113 = math.exp %112 : vector<1x16xf32>
    %cst_45 = arith.constant 1.000000e+00 : f32
    %114 = vector.broadcast %cst_45 : f32 to vector<1x16xf32>
    %115 = arith.subf %113, %114 : vector<1x16xf32>
    %cst_46 = arith.constant 1.000000e+00 : f32
    %116 = vector.broadcast %cst_46 : f32 to vector<1x16xf32>
    %117 = arith.mulf %115, %116 : vector<1x16xf32>
    %cst_47 = arith.constant 5.000000e-01 : f32
    %118 = vector.broadcast %cst_47 : f32 to vector<1x16xf32>
    %119 = arith.addf %117, %118 : vector<1x16xf32>
    %120 = arith.fptosi %119 : vector<1x16xf32> to vector<1x16xi32>
    %c0_48 = arith.constant 0 : index
    %c0_49 = arith.constant 0 : index
    %c0_50 = arith.constant 0 : index
    %121 = vector.load %arg12[%c0_48, %c0_49, %c0_50] : memref<1x1x16xi32, #tpu.memory_space<vmem>>, vector<1x1x16xi32>
    %122 = vector.shape_cast %121 : vector<1x1x16xi32> to vector<1x16xi32>
    %123 = vector.shape_cast %120 : vector<1x16xi32> to vector<1x1x16xi32>
    tpu.vector_store %arg12[%c0_48, %c0_49, %c0_50], %123 {strides = array<i32>} : memref<1x1x16xi32, #tpu.memory_space<vmem>>, vector<1x1x16xi32>,
    return
  }
  func.func @transform_0(%arg0: i32) -> (i32, i32) {
    %c0_i32 = arith.constant 0 : i32
    %c0_i32_0 = arith.constant 0 : i32
    return %arg0, %c0_i32 : i32, i32
  }
  func.func @transform_1(%arg0: i32) -> (i32, i32) {
    %c0_i32 = arith.constant 0 : i32
    %c0_i32_0 = arith.constant 0 : i32
    %c0_i32_1 = arith.constant 0 : i32
    return %c0_i32, %c0_i32_0 : i32, i32
  }
  func.func @transform_2(%arg0: i32) -> (i32, i32) {
    %c0_i32 = arith.constant 0 : i32
    %c0_i32_0 = arith.constant 0 : i32
    %c0_i32_1 = arith.constant 0 : i32
    return %c0_i32, %c0_i32_0 : i32, i32
  }
  func.func @transform_3(%arg0: i32) -> (i32, i32) {
    %c0_i32 = arith.constant 0 : i32
    %c0_i32_0 = arith.constant 0 : i32
    %c0_i32_1 = arith.constant 0 : i32
    return %c0_i32, %c0_i32_0 : i32, i32
  }
  func.func @transform_4(%arg0: i32) -> (i32, i32) {
    %c0_i32 = arith.constant 0 : i32
    %c0_i32_0 = arith.constant 0 : i32
    %c0_i32_1 = arith.constant 0 : i32
    return %c0_i32, %c0_i32_0 : i32, i32
  }
  func.func @transform_5(%arg0: i32) -> (i32, i32) {
    %c0_i32 = arith.constant 0 : i32
    %c0_i32_0 = arith.constant 0 : i32
    %c0_i32_1 = arith.constant 0 : i32
    return %c0_i32, %c0_i32_0 : i32, i32
  }
  func.func @transform_6(%arg0: i32) -> (i32, i32) {
    %c0_i32 = arith.constant 0 : i32
    %c0_i32_0 = arith.constant 0 : i32
    %c0_i32_1 = arith.constant 0 : i32
    return %c0_i32, %c0_i32_0 : i32, i32
  }
  func.func @transform_7(%arg0: i32) -> (i32, i32) {
    %c0_i32 = arith.constant 0 : i32
    %c0_i32_0 = arith.constant 0 : i32
    %c0_i32_1 = arith.constant 0 : i32
    return %c0_i32, %c0_i32_0 : i32, i32
  }
  func.func @transform_8(%arg0: i32) -> (i32, i32) {
    %c0_i32 = arith.constant 0 : i32
    %c0_i32_0 = arith.constant 0 : i32
    %c0_i32_1 = arith.constant 0 : i32
    return %c0_i32, %c0_i32_0 : i32, i32
  }
  func.func @transform_9(%arg0: i32) -> (i32, i32) {
    %c0_i32 = arith.constant 0 : i32
    %c0_i32_0 = arith.constant 0 : i32
    %c0_i32_1 = arith.constant 0 : i32
    return %c0_i32, %c0_i32_0 : i32, i32
  }
  func.func @transform_10(%arg0: i32) -> (i32, i32) {
    %c0_i32 = arith.constant 0 : i32
    %c0_i32_0 = arith.constant 0 : i32
    %c0_i32_1 = arith.constant 0 : i32
    return %c0_i32, %c0_i32_0 : i32, i32
  }
  func.func @transform_11(%arg0: i32) -> (i32, i32, i32) {
    %c0_i32 = arith.constant 0 : i32
    %c0_i32_0 = arith.constant 0 : i32
    %c0_i32_1 = arith.constant 0 : i32
    return %arg0, %c0_i32, %c0_i32_0 : i32, i32, i32
  }
}

</mosaic_0001>

<llo_original>
// kernel: tpu_custom_call.1
$region0: #{tpu_custom_call.1}
  #allocation0 [shape = 'u32[]', space=smem, size = 0x4, offset = 0x4, fixed_abs, tag = 'smem constant byte address 0x4 - core index']
  #allocation1 [shape = 'u32[72,128]{1,0:T(1,128)}', space=vmem, size = 0x9000, scoped, tag = 'internal scratch']
  #allocation2 [shape = 'f32[1,1]{1,0:T(1,128)S(1)}', space=vmem, size = 0x200, scoped, tag = 'scoped memory for tpu_custom_call.1']
  %s0 = inlined_call_operand.hbm [shape: f32[32,32], index: 0, kind: input, shape index: {}]
  %s1 = inlined_call_operand.hbm [shape: f32[32,96], index: 1, kind: input, shape index: {}]
  %s2 = inlined_call_operand.vmem [shape: f32[1,32], index: 2, kind: input, shape index: {}]
  %s3 = inlined_call_operand.vmem [shape: f32[1,32], index: 3, kind: input, shape index: {}]
  %s4 = inlined_call_operand.vmem [shape: f32[1,32], index: 4, kind: input, shape index: {}]
  %s5 = inlined_call_operand.hbm [shape: f32[32,96], index: 5, kind: input, shape index: {}]
  %s6 = inlined_call_operand.vmem [shape: f32[1,32], index: 6, kind: input, shape index: {}]
  %s7 = inlined_call_operand.vmem [shape: f32[1,32], index: 7, kind: input, shape index: {}]
  %s8 = inlined_call_operand.vmem [shape: f32[1,32], index: 8, kind: input, shape index: {}]
  %s9 = inlined_call_operand.vmem [shape: f32[1,32], index: 9, kind: input, shape index: {}]
  %s10 = inlined_call_operand.<no memory space> [shape: f32[1,1], index: 10, kind: input, shape index: {}]
  %s11 = inlined_call_operand.hbm [shape: s32[2,1,16], index: 11, kind: output, shape index: {}]
  %s12 = sld [smem:[#allocation0]]
  $region89: #{tpu_custom_call.1} parent=0
    _
  %s14 = ssub.s32 1, %s12
  %s15 = scalar_select 0, %s14, %s12
  %v16 = vstv %s10
  %17 = vst [vmem:[#allocation2] sm:$0x1] %v16
  $region1: #{tpu_custom_call.1} parent=0
    #allocation3 [shape = 'u8[16384]{0}', space=vmem, size = 0x4000, scoped, tag = 'input window, operand 0']
    #allocation4 [shape = 's32[2]{0}', space=sflag, size = 0x8, scoped, tag = 'scoped memory for tpu_custom_call.1']
    #allocation5 [shape = 's32[2]{0}', space=sflag, size = 0x8, scoped, tag = 'scoped memory for tpu_custom_call.1']
    #allocation6 [shape = 'u8[16384]{0}', space=vmem, size = 0x4000, scoped, tag = 'input window, operand 1, single buffered']
    #allocation7 [shape = 's32[1]{0}', space=sflag, size = 0x4, scoped, tag = 'scoped memory for tpu_custom_call.1']
    #allocation8 [shape = 'u8[16384]{0}', space=vmem, size = 0x4000, scoped, tag = 'input window, operand 5, single buffered']
    #allocation9 [shape = 'u8[1024]{0}', space=vmem, size = 0x400, scoped, tag = 'output window, operand 0']
    %18 = vsyncpa [#allocation4], 0
    %s19 = scalar_lea.sflag [#allocation4], 1
    %20 = vsyncpa %s19, 0
    %21 = vsyncpa [#allocation7], 0
    %22 = vsyncpa [#allocation5], 0
    %s23 = scalar_lea.sflag [#allocation5], 1
    %24 = vsyncpa %s23, 0
    loop: start=0, step=1, limit=4
    $region2: #{tpu_custom_call.1} parent=1 // loop_pre_header
      _
    $region3: #{tpu_custom_call.1} parent=1 // loop_header
      %s26 = sphi 0, %s30
      %p27 = scmp.ge.s32.totalorder %s26, 4
      %s36 = sphi 0, %s38
      %s39 = sphi 0, %s36
      %s40 = sphi 0, %s39
      %s56 = sphi 0, %s40
      %s60 = sphi 0, %s60
      %s62 = sphi 0, %s60
      %s63 = sphi 0, %s62
      %s77 = sphi 0, %s63
      %s81 = sphi 0, %s81
      %s83 = sphi 0, %s81
      %s84 = sphi 0, %s83
      %s98 = sphi 0, %s84
      %s102 = sphi 0, %s102
      %s104 = sphi 0, %s102
      %s105 = sphi 0, %s104
      %s119 = sphi 0, %s105
      %s123 = sphi 0, %s123
      %s125 = sphi 0, %s123
      %s126 = sphi 0, %s125
      %s140 = sphi 0, %s126
      %s144 = sphi 0, %s144
      %s146 = sphi 0, %s144
      %s147 = sphi 0, %s146
      %s161 = sphi 0, %s147
      %s165 = sphi 0, %s165
      %s167 = sphi 0, %s165
      %s168 = sphi 0, %s167
      %s182 = sphi 0, %s168
      %s186 = sphi 0, %s186
      %s188 = sphi 0, %s186
      %s189 = sphi 0, %s188
      %s203 = sphi 0, %s189
      %s207 = sphi 0, %s207
      %s209 = sphi 0, %s207
      %s210 = sphi 0, %s209
      %s224 = sphi 0, %s210
      %s228 = sphi 0, %s228
      %s230 = sphi 0, %s228
      %s231 = sphi 0, %s230
      %s245 = sphi 0, %s231
      %s249 = sphi 0, %s249
      %s251 = sphi 0, %s249
      %s252 = sphi 0, %s251
      %s266 = sphi 0, %s252
      %s272 = sphi 0, %s274
      %s275 = sphi 0, %s272
      %s276 = sphi 0, %s275
      %s292 = sphi 0, %s276
    $region4: #{tpu_custom_call.1} parent=1 // loop_header_branch
      %29 = sbr.rel (%p27) target = $region8
    $region5: #{tpu_custom_call.1} parent=1 // loop_body
      %s31 = ssub.s32 %s26, 1
      %s32 = ssub.s32 %s26, 2
      %s33 = sadd.s32 %s26, 1
      %s34 = ssub.s32 %s26, %s33
      %p35 = scmp.eq.s32.totalorder %s34, 0
      %s37 = sadd.s32 %s36, 1
      %s38 = scalar_select %p35, %s36, %s37
      %p41 = pneg %p35
      %p42 = scmp.eq.s32.totalorder %s26, 1
      %p43 = por %p41, %p42
      %p44 = scmp.ne.s32.totalorder %s36, %s39
      %p45 = scmp.eq.s32.totalorder %s26, 0
      %p46 = por %p44, %p45
      %p47 = scmp.ne.s32.totalorder %s36, %s39
      %p48 = scmp.eq.s32.totalorder %s31, 1
      %p49 = por %p47, %p48
      %p50 = scmp.ne.s32.totalorder %s39, %s40
      %p51 = scmp.eq.s32.totalorder %s31, 0
      %p52 = por %p50, %p51
      %p53 = scmp.ne.s32.totalorder %s39, %s40
      %p54 = scmp.eq.s32.totalorder %s32, 1
      %p55 = por %p53, %p54
      %p57 = scmp.ne.s32.totalorder %s40, %s56
      %p58 = scmp.eq.s32.totalorder %s32, 0
      %p59 = por %p57, %p58
      %s61 = sadd.s32 %s60, 1
      %p64 = scmp.eq.s32.totalorder %s26, 1
      %p65 = scmp.ne.s32.totalorder %s60, %s62
      %p66 = scmp.eq.s32.totalorder %s26, 0
      %p67 = por %p65, %p66
      %p68 = scmp.ne.s32.totalorder %s60, %s62
      %p69 = scmp.eq.s32.totalorder %s31, 1
      %p70 = por %p68, %p69
      %p71 = scmp.ne.s32.totalorder %s62, %s63
      %p72 = scmp.eq.s32.totalorder %s31, 0
      %p73 = por %p71, %p72
      %p74 = scmp.ne.s32.totalorder %s62, %s63
      %p75 = scmp.eq.s32.totalorder %s32, 1
      %p76 = por %p74, %p75
      %p78 = scmp.ne.s32.totalorder %s63, %s77
      %p79 = scmp.eq.s32.totalorder %s32, 0
      %p80 = por %p78, %p79
      %s82 = sadd.s32 %s81, 1
      %p85 = scmp.eq.s32.totalorder %s26, 1
      %p86 = scmp.ne.s32.totalorder %s81, %s83
      %p87 = scmp.eq.s32.totalorder %s26, 0
      %p88 = por %p86, %p87
      %p89 = scmp.ne.s32.totalorder %s81, %s83
      %p90 = scmp.eq.s32.totalorder %s31, 1
      %p91 = por %p89, %p90
      %p92 = scmp.ne.s32.totalorder %s83, %s84
      %p93 = scmp.eq.s32.totalorder %s31, 0
      %p94 = por %p92, %p93
      %p95 = scmp.ne.s32.totalorder %s83, %s84
      %p96 = scmp.eq.s32.totalorder %s32, 1
      %p97 = por %p95, %p96
      %p99 = scmp.ne.s32.totalorder %s84, %s98
      %p100 = scmp.eq.s32.totalorder %s32, 0
      %p101 = por %p99, %p100
      %s103 = sadd.s32 %s102, 1
      %p106 = scmp.eq.s32.totalorder %s26, 1
      %p107 = scmp.ne.s32.totalorder %s102, %s104
      %p108 = scmp.eq.s32.totalorder %s26, 0
      %p109 = por %p107, %p108
      %p110 = scmp.ne.s32.totalorder %s102, %s104
      %p111 = scmp.eq.s32.totalorder %s31, 1
      %p112 = por %p110, %p111
      %p113 = scmp.ne.s32.totalorder %s104, %s105
      %p114 = scmp.eq.s32.totalorder %s31, 0
      %p115 = por %p113, %p114
      %p116 = scmp.ne.s32.totalorder %s104, %s105
      %p117 = scmp.eq.s32.totalorder %s32, 1
      %p118 = por %p116, %p117
      %p120 = scmp.ne.s32.totalorder %s105, %s119
      %p121 = scmp.eq.s32.totalorder %s32, 0
      %p122 = por %p120, %p121
      %s124 = sadd.s32 %s123, 1
      %p127 = scmp.eq.s32.totalorder %s26, 1
      %p128 = scmp.ne.s32.totalorder %s123, %s125
      %p129 = scmp.eq.s32.totalorder %s26, 0
      %p130 = por %p128, %p129
      %p131 = scmp.ne.s32.totalorder %s123, %s125
      %p132 = scmp.eq.s32.totalorder %s31, 1
      %p133 = por %p131, %p132
      %p134 = scmp.ne.s32.totalorder %s125, %s126
      %p135 = scmp.eq.s32.totalorder %s31, 0
      %p136 = por %p134, %p135
      %p137 = scmp.ne.s32.totalorder %s125, %s126
      %p138 = scmp.eq.s32.totalorder %s32, 1
      %p139 = por %p137, %p138
      %p141 = scmp.ne.s32.totalorder %s126, %s140
      %p142 = scmp.eq.s32.totalorder %s32, 0
      %p143 = por %p141, %p142
      %s145 = sadd.s32 %s144, 1
      %p148 = scmp.eq.s32.totalorder %s26, 1
      %p149 = scmp.ne.s32.totalorder %s144, %s146
      %p150 = scmp.eq.s32.totalorder %s26, 0
      %p151 = por %p149, %p150
      %p152 = scmp.ne.s32.totalorder %s144, %s146
      %p153 = scmp.eq.s32.totalorder %s31, 1
      %p154 = por %p152, %p153
      %p155 = scmp.ne.s32.totalorder %s146, %s147
      %p156 = scmp.eq.s32.totalorder %s31, 0
      %p157 = por %p155, %p156
      %p158 = scmp.ne.s32.totalorder %s146, %s147
      %p159 = scmp.eq.s32.totalorder %s32, 1
      %p160 = por %p158, %p159
      %p162 = scmp.ne.s32.totalorder %s147, %s161
      %p163 = scmp.eq.s32.totalorder %s32, 0
      %p164 = por %p162, %p163
      %s166 = sadd.s32 %s165, 1
      %p169 = scmp.eq.s32.totalorder %s26, 1
      %p170 = scmp.ne.s32.totalorder %s165, %s167
      %p171 = scmp.eq.s32.totalorder %s26, 0
      %p172 = por %p170, %p171
      %p173 = scmp.ne.s32.totalorder %s165, %s167
      %p174 = scmp.eq.s32.totalorder %s31, 1
      %p175 = por %p173, %p174
      %p176 = scmp.ne.s32.totalorder %s167, %s168
      %p177 = scmp.eq.s32.totalorder %s31, 0
      %p178 = por %p176, %p177
      %p179 = scmp.ne.s32.totalorder %s167, %s168
      %p180 = scmp.eq.s32.totalorder %s32, 1
      %p181 = por %p179, %p180
      %p183 = scmp.ne.s32.totalorder %s168, %s182
      %p184 = scmp.eq.s32.totalorder %s32, 0
      %p185 = por %p183, %p184
      %s187 = sadd.s32 %s186, 1
      %p190 = scmp.eq.s32.totalorder %s26, 1
      %p191 = scmp.ne.s32.totalorder %s186, %s188
      %p192 = scmp.eq.s32.totalorder %s26, 0
      %p193 = por %p191, %p192
      %p194 = scmp.ne.s32.totalorder %s186, %s188
      %p195 = scmp.eq.s32.totalorder %s31, 1
      %p196 = por %p194, %p195
      %p197 = scmp.ne.s32.totalorder %s188, %s189
      %p198 = scmp.eq.s32.totalorder %s31, 0
      %p199 = por %p197, %p198
      %p200 = scmp.ne.s32.totalorder %s188, %s189
      %p201 = scmp.eq.s32.totalorder %s32, 1
      %p202 = por %p200, %p201
      %p204 = scmp.ne.s32.totalorder %s189, %s203
      %p205 = scmp.eq.s32.totalorder %s32, 0
      %p206 = por %p204, %p205
      %s208 = sadd.s32 %s207, 1
      %p211 = scmp.eq.s32.totalorder %s26, 1
      %p212 = scmp.ne.s32.totalorder %s207, %s209
      %p213 = scmp.eq.s32.totalorder %s26, 0
      %p214 = por %p212, %p213
      %p215 = scmp.ne.s32.totalorder %s207, %s209
      %p216 = scmp.eq.s32.totalorder %s31, 1
      %p217 = por %p215, %p216
      %p218 = scmp.ne.s32.totalorder %s209, %s210
      %p219 = scmp.eq.s32.totalorder %s31, 0
      %p220 = por %p218, %p219
      %p221 = scmp.ne.s32.totalorder %s209, %s210
      %p222 = scmp.eq.s32.totalorder %s32, 1
      %p223 = por %p221, %p222
      %p225 = scmp.ne.s32.totalorder %s210, %s224
      %p226 = scmp.eq.s32.totalorder %s32, 0
      %p227 = por %p225, %p226
      %s229 = sadd.s32 %s228, 1
      %p232 = scmp.eq.s32.totalorder %s26, 1
      %p233 = scmp.ne.s32.totalorder %s228, %s230
      %p234 = scmp.eq.s32.totalorder %s26, 0
      %p235 = por %p233, %p234
      %p236 = scmp.ne.s32.totalorder %s228, %s230
      %p237 = scmp.eq.s32.totalorder %s31, 1
      %p238 = por %p236, %p237
      %p239 = scmp.ne.s32.totalorder %s230, %s231
      %p240 = scmp.eq.s32.totalorder %s31, 0
      %p241 = por %p239, %p240
      %p242 = scmp.ne.s32.totalorder %s230, %s231
      %p243 = scmp.eq.s32.totalorder %s32, 1
      %p244 = por %p242, %p243
      %p246 = scmp.ne.s32.totalorder %s231, %s245
      %p247 = scmp.eq.s32.totalorder %s32, 0
      %p248 = por %p246, %p247
      %s250 = sadd.s32 %s249, 1
      %p253 = scmp.eq.s32.totalorder %s26, 1
      %p254 = scmp.ne.s32.totalorder %s249, %s251
      %p255 = scmp.eq.s32.totalorder %s26, 0
      %p256 = por %p254, %p255
      %p257 = scmp.ne.s32.totalorder %s249, %s251
      %p258 = scmp.eq.s32.totalorder %s31, 1
      %p259 = por %p257, %p258
      %p260 = scmp.ne.s32.totalorder %s251, %s252
      %p261 = scmp.eq.s32.totalorder %s31, 0
      %p262 = por %p260, %p261
      %p263 = scmp.ne.s32.totalorder %s251, %s252
      %p264 = scmp.eq.s32.totalorder %s32, 1
      %p265 = por %p263, %p264
      %p267 = scmp.ne.s32.totalorder %s252, %s266
      %p268 = scmp.eq.s32.totalorder %s32, 0
      %p269 = por %p267, %p268
      %s270 = ssub.s32 %s26, %s33
      %p271 = scmp.eq.s32.totalorder %s270, 0
      %s273 = sadd.s32 %s272, 1
      %s274 = scalar_select %p271, %s272, %s273
      %p277 = pneg %p271
      %p278 = scmp.eq.s32.totalorder %s26, 1
      %p279 = por %p277, %p278
      %p280 = scmp.ne.s32.totalorder %s272, %s275
      %p281 = scmp.eq.s32.totalorder %s26, 0
      %p282 = por %p280, %p281
      %p283 = scmp.ne.s32.totalorder %s272, %s275
      %p284 = scmp.eq.s32.totalorder %s31, 1
      %p285 = por %p283, %p284
      %p286 = scmp.ne.s32.totalorder %s275, %s276
      %p287 = scmp.eq.s32.totalorder %s31, 0
      %p288 = por %p286, %p287
      %p289 = scmp.ne.s32.totalorder %s275, %s276
      %p290 = scmp.eq.s32.totalorder %s32, 1
      %p291 = por %p289, %p290
      %p293 = scmp.ne.s32.totalorder %s276, %s292
      %p294 = scmp.eq.s32.totalorder %s32, 0
      %p295 = por %p293, %p294
      %p296 = scmp.le.s32.totalorder 1, %s26
      %p297 = scmp.lt.s32.totalorder %s26, 3
      %p298 = pnand %p296, %p297
      %p299 = pneg %p298
      // Predicated region
      $region9: #{tpu_custom_call.1} parent=5 // pred_check
        _
      $region10: #{tpu_custom_call.1} parent=5 // pred_check_branch
        %301 = sbr.rel (%p298) target = $region12
      $region11: #{tpu_custom_call.1} parent=5 // pred_region
        %s302 = ssub.s32 %s26, 1
        // Predicated region
        $region13: #{tpu_custom_call.1} parent=11 // pred_check
          %p303 = pneg %p73
        $region14: #{tpu_custom_call.1} parent=11 // pred_check_branch
          %305 = sbr.rel (%p303) target = $region16
        $region15: #{tpu_custom_call.1} parent=11 // pred_region
          %307 = vsyncadd [#allocation7], 0
          %s308 = sshll.u32 %s1, 4
          %s309 = int_to_ptr.hbm [resolvable:$true] %s308
          %s310 = sshll.u32 [#allocation6], 4
          %s311 = int_to_ptr.vmem [resolvable:$true] %s310
          %316 = dma.hbm_to_vmem [thread:$0]  %s309, 512, %s311, [#allocation7], 128, 128, 8
        $region16: #{tpu_custom_call.1} parent=11 // pred_fallthru
          _
        // Predicated region
        $region17: #{tpu_custom_call.1} parent=11 // pred_check
          %p317 = pneg %p94
        $region18: #{tpu_custom_call.1} parent=11 // pred_check_branch
          %319 = sbr.rel (%p317) target = $region20
        $region19: #{tpu_custom_call.1} parent=11 // pred_region
          _
        $region20: #{tpu_custom_call.1} parent=11 // pred_fallthru
          _
        // Predicated region
        $region21: #{tpu_custom_call.1} parent=11 // pred_check
          %p320 = pneg %p115
        $region22: #{tpu_custom_call.1} parent=11 // pred_check_branch
          %322 = sbr.rel (%p320) target = $region24
        $region23: #{tpu_custom_call.1} parent=11 // pred_region
          _
        $region24: #{tpu_custom_call.1} parent=11 // pred_fallthru
          _
        // Predicated region
        $region25: #{tpu_custom_call.1} parent=11 // pred_check
          %p323 = pneg %p136
        $region26: #{tpu_custom_call.1} parent=11 // pred_check_branch
          %325 = sbr.rel (%p323) target = $region28
        $region27: #{tpu_custom_call.1} parent=11 // pred_region
          _
        $region28: #{tpu_custom_call.1} parent=11 // pred_fallthru
          _
        // Predicated region
        $region29: #{tpu_custom_call.1} parent=11 // pred_check
          %p326 = pneg %p157
        $region30: #{tpu_custom_call.1} parent=11 // pred_check_branch
          %328 = sbr.rel (%p326) target = $region32
        $region31: #{tpu_custom_call.1} parent=11 // pred_region
          %330 = vsyncadd [#allocation7], 0
          %s331 = sshll.u32 %s5, 4
          %s332 = int_to_ptr.hbm [resolvable:$true] %s331
          %s333 = sshll.u32 [#allocation8], 4
          %s334 = int_to_ptr.vmem [resolvable:$true] %s333
          %339 = dma.hbm_to_vmem [thread:$0]  %s332, 512, %s334, [#allocation7], 128, 128, 8
        $region32: #{tpu_custom_call.1} parent=11 // pred_fallthru
          _
        // Predicated region
        $region33: #{tpu_custom_call.1} parent=11 // pred_check
          %p340 = pneg %p178
        $region34: #{tpu_custom_call.1} parent=11 // pred_check_branch
          %342 = sbr.rel (%p340) target = $region36
        $region35: #{tpu_custom_call.1} parent=11 // pred_region
          _
        $region36: #{tpu_custom_call.1} parent=11 // pred_fallthru
          _
        // Predicated region
        $region37: #{tpu_custom_call.1} parent=11 // pred_check
          %p343 = pneg %p199
        $region38: #{tpu_custom_call.1} parent=11 // pred_check_branch
          %345 = sbr.rel (%p343) target = $region40
        $region39: #{tpu_custom_call.1} parent=11 // pred_region
          _
        $region40: #{tpu_custom_call.1} parent=11 // pred_fallthru
          _
        // Predicated region
        $region41: #{tpu_custom_call.1} parent=11 // pred_check
          %p346 = pneg %p220
        $region42: #{tpu_custom_call.1} parent=11 // pred_check_branch
          %348 = sbr.rel (%p346) target = $region44
        $region43: #{tpu_custom_call.1} parent=11 // pred_region
          _
        $region44: #{tpu_custom_call.1} parent=11 // pred_fallthru
          _
        // Predicated region
        $region45: #{tpu_custom_call.1} parent=11 // pred_check
          %p349 = pneg %p241
        $region46: #{tpu_custom_call.1} parent=11 // pred_check_branch
          %351 = sbr.rel (%p349) target = $region48
        $region47: #{tpu_custom_call.1} parent=11 // pred_region
          _
        $region48: #{tpu_custom_call.1} parent=11 // pred_fallthru
          _
        // Predicated region
        $region49: #{tpu_custom_call.1} parent=11 // pred_check
          %p352 = pneg %p262
        $region50: #{tpu_custom_call.1} parent=11 // pred_check_branch
          %354 = sbr.rel (%p352) target = $region52
        $region51: #{tpu_custom_call.1} parent=11 // pred_region
          _
        $region52: #{tpu_custom_call.1} parent=11 // pred_fallthru
          _
      $region12: #{tpu_custom_call.1} parent=5 // pred_fallthru
        _
      %p355 = scmp.lt.s32.totalorder %s26, 2
      // Predicated region
      $region53: #{tpu_custom_call.1} parent=5 // pred_check
        %p356 = pneg %p355
      $region54: #{tpu_custom_call.1} parent=5 // pred_check_branch
        %358 = sbr.rel (%p356) target = $region56
      $region55: #{tpu_custom_call.1} parent=5 // pred_region
        // Predicated region
        $region57: #{tpu_custom_call.1} parent=55 // pred_check
          %p359 = pneg %p46
        $region58: #{tpu_custom_call.1} parent=55 // pred_check_branch
          %361 = sbr.rel (%p359) target = $region60
        $region59: #{tpu_custom_call.1} parent=55 // pred_region
          %s362 = sand.u32 %s36, 1
          %s363 = scalar_lea.sflag [#allocation4], %s362
          %s364 = sand.u32 %s36, 1
          %s365 = smul.addr %s364, 16
          %s366 = scalar_lea.vmem [#allocation3], %s365
          %s367 = smul.u32 2, %s26
          %369 = vsyncadd %s363, 0
          %s370 = smul.addr %s367, 8
          %s371 = scalar_lea.hbm %s0, %s370
          %s372 = sshll.u32 %s371, 4
          %s373 = int_to_ptr.hbm [resolvable:$true] %s372
          %s374 = sshll.u32 %s366, 4
          %s375 = int_to_ptr.vmem [resolvable:$true] %s374
          %380 = dma.hbm_to_vmem [thread:$0]  %s373, 256, %s375, %s363, 128, 128, 8
        $region60: #{tpu_custom_call.1} parent=55 // pred_fallthru
          _
      $region56: #{tpu_custom_call.1} parent=5 // pred_fallthru
        _
      %p381 = scmp.le.s32.totalorder 1, %s26
      %p382 = scmp.lt.s32.totalorder %s26, 3
      %p383 = pnand %p381, %p382
      %p384 = pneg %p383
      // Predicated region
      $region61: #{tpu_custom_call.1} parent=5 // pred_check
        _
      $region62: #{tpu_custom_call.1} parent=5 // pred_check_branch
        %386 = sbr.rel (%p383) target = $region64
      $region63: #{tpu_custom_call.1} parent=5 // pred_region
        %s387 = ssub.s32 %s26, 1
        %s388 = sand.u32 %s39, 1
        %s389 = scalar_lea.sflag [#allocation4], %s388
        %s390 = sand.u32 %s39, 1
        %s391 = smul.addr %s390, 16
        %s392 = scalar_lea.vmem [#allocation3], %s391
        // Predicated region
        $region65: #{tpu_custom_call.1} parent=63 // pred_check
          %p393 = pneg %p52
        $region66: #{tpu_custom_call.1} parent=63 // pred_check_branch
          %395 = sbr.rel (%p393) target = $region68
        $region67: #{tpu_custom_call.1} parent=63 // pred_region
          %397 = dma.done %s389, 256
        $region68: #{tpu_custom_call.1} parent=63 // pred_fallthru
          _
        // Predicated region
        $region69: #{tpu_custom_call.1} parent=63 // pred_check
          %p398 = pneg %p73
        $region70: #{tpu_custom_call.1} parent=63 // pred_check_branch
          %400 = sbr.rel (%p398) target = $region72
        $region71: #{tpu_custom_call.1} parent=63 // pred_region
          %402 = dma.done [#allocation7], 512
        $region72: #{tpu_custom_call.1} parent=63 // pred_fallthru
          _
        // Predicated region
        $region73: #{tpu_custom_call.1} parent=63 // pred_check
          %p403 = pneg %p157
        $region74: #{tpu_custom_call.1} parent=63 // pred_check_branch
          %405 = sbr.rel (%p403) target = $region76
        $region75: #{tpu_custom_call.1} parent=63 // pred_region
          %407 = dma.done [#allocation7], 512
        $region76: #{tpu_custom_call.1} parent=63 // pred_fallthru
          _
        %s408 = sand.u32 %s39, 1
        %s409 = scalar_lea.sflag [#allocation4], %s408
        %s410 = sand.u32 %s39, 1
        %s411 = smul.addr %s410, 16
        %s412 = scalar_lea.vmem [#allocation3], %s411
        %p413 = pneg %p52
        %p414 = pneg %p49
        %p415 = pneg %p73
        %p416 = pneg %p70
        %p417 = pneg %p94
        %p418 = pneg %p91
        %p419 = pneg %p115
        %p420 = pneg %p112
        %p421 = pneg %p136
        %p422 = pneg %p133
        %p423 = pneg %p157
        %p424 = pneg %p154
        %p425 = pneg %p178
        %p426 = pneg %p175
        %p427 = pneg %p199
        %p428 = pneg %p196
        %p429 = pneg %p220
        %p430 = pneg %p217
        %p431 = pneg %p241
        %p432 = pneg %p238
        %p433 = pneg %p262
        %p434 = pneg %p259
        %p435 = pneg %p288
        %p436 = pneg %p285
        %s437 = sand.u32 %s275, 1
        %s438 = scalar_lea.sflag [#allocation5], %s437
        %s439 = sand.u32 %s275, 1
        %s440 = scalar_lea.vmem [#allocation9], %s439
        %s441 = smul.u32 2, %s31
        %v442 = vld [vmem:[%s392] sm:$0xff]
        %v443 = vld [vmem:[%s392 + $0x8] sm:$0xff]
        %v444 = vlaneseq
        %v445 = vshrl.u32 %v444, 7
        %v446 = vadd.s32 %v445, 8
        %vm447 = vcmp.eq.s32.totalorder %v445, 0
        %vm448 = vcmp.eq.s32.totalorder %v446, 0
        %vm449 = vcmp.eq.s32.totalorder %v445, 8
        %vm450 = vcmp.eq.s32.totalorder %v446, 8
        %vm451 = vmor %vm447, %vm449
        %vm452 = vmor %vm448, %vm450
        %vm453 = vcmp.eq.s32.totalorder %v445, 7
        %vm454 = vcmp.eq.s32.totalorder %v446, 7
        %vm455 = vcmp.eq.s32.totalorder %v445, 15
        %vm456 = vcmp.eq.s32.totalorder %v446, 15
        %vm457 = vmor %vm453, %vm455
        %vm458 = vmor %vm454, %vm456
        %vm459 = vmxor %vm451, 1
        %vm460 = vmxor %vm452, 1
        %vm461 = vmxor %vm457, 1
        %vm462 = vmxor %vm458, 1
        %v463 = vld [vmem:[#allocation6] sm:$0xff]
        %v464 = vld [vmem:[#allocation6 + $0x8] sm:$0xff]
        %v465 = vld [vmem:[#allocation6 + $0x10] sm:$0xff]
        %v466 = vld [vmem:[#allocation6 + $0x18] sm:$0xff]
        %vm467 = vcmask 261120
        %v469 = vsel %vm467, %v442, 0
        %v472 = vsel %vm467, %v443, 0
        %474 = vmatpush.msra.mxu0 0.0
        %475 = vmatpush.msra.mxu0 0.0
        %476 = vmatpush.msra.mxu0 0.0
        %477 = vmatpush.msra.mxu0 0.0
        %478 = vmatpush.msra.mxu0 0.0
        %479 = vmatpush.msra.mxu0 0.0
        %480 = vmatpush.msra.mxu0 0.0
        %481 = vmatpush.msra.mxu0 0.0
        %482 = vmatpush.msra.mxu0 0.0
        %483 = vmatpush.msra.mxu0 0.0
        %484 = vmatpush.msra.mxu0 0.0
        %485 = vmatpush.msra.mxu0 0.0
        %486 = vmatpush.msra.mxu0 %v466
        %487 = vmatpush.msra.mxu0 %v465
        %488 = vmatpush.msra.mxu0 %v464
        %489 = vmatpush.msra.mxu0 %v463
        %490 = vmatmul.f32.gmra.mxu0 %v469
        %v491 = vpop.f32.mrf.mxu0
        %v492 = vadd.f32 0.0, %v491
        %493 = vmatmul.f32.gmra.mxu0 %v472
        %v494 = vpop.f32.mrf.mxu0
        %v495 = vadd.f32 0.0, %v494
        %496 = vdwg.mxu0
        %v497 = vrot.slane %v492, 7
        %v498 = vrot.slane %v495, 7
        %vm499 = vcmp.lt.s32.totalorder %v445, 1
        %v500 = vsel %vm499, %v497, %v498
        %v501 = vsel %vm499, %v498, %v497
        %v502 = vsel %vm459, 1, 0
        %v503 = vsel %vm460, 1, 0
        %vm504 = vcmp.eq.s32.totalorder %v502, 1
        %vm505 = vcmp.eq.s32.totalorder %v503, 1
        %v506 = vsel %vm504, %v501, 0.0
        %v507 = vsel %vm505, %v500, 0.0
        %510 = vrot.lane.b32.xlu0 %v492, 64
        %v511 = vpop.permute.xlu0 %510
        %512 = vrot.lane.b32.xlu0 %v495, 64
        %v513 = vpop.permute.xlu0 %512
        %v516 = vrot.slane %v511, 1
        %v517 = vrot.slane %v513, 1
        %vm518 = vcmp.lt.s32.totalorder %v445, 7
        %v519 = vsel %vm518, %v516, %v517
        %v520 = vsel %vm518, %v517, %v516
        %v521 = vsel %vm461, 1, 0
        %v522 = vsel %vm462, 1, 0
        %vm523 = vcmp.eq.s32.totalorder %v521, 1
        %vm524 = vcmp.eq.s32.totalorder %v522, 1
        %v525 = vsel %vm523, %v519, 0.0
        %v526 = vsel %vm524, %v520, 0.0
        %527 = vrot.lane.b32.xlu0 %v492, 96
        %v528 = vpop.permute.xlu0 %527
        %529 = vrot.lane.b32.xlu0 %v495, 96
        %v530 = vpop.permute.xlu0 %529
        %v533 = vadd.f32 %v506, %v528
        %v534 = vadd.f32 %v507, %v530
        %v535 = vadd.f32 %v533, %v525
        %v536 = vadd.f32 %v534, %v526
        %v537 = vld [vmem:[%s2] sm:$0x1]
        %v539 = vperm.slane %v537, 0
        %v541 = vadd.f32 %v535, %v539
        %v542 = vadd.f32 %v536, %v539
        %v543 = vsel %vm467, %v541, 0.0
        %544 = vadd.xlane.f32.xlu0 %v543
        %v545 = vpop.xlane.xlu0 %544
        %v546 = vsel %vm467, %v542, 0.0
        %547 = vadd.xlane.f32.xlu0 %v546
        %v548 = vpop.xlane.xlu0 %547
        %v549 = vrcp.pop 32.0
        %v550 = vmul.f32 32.0, %v549
        %v551 = vsub.f32 1.0, %v550
        %v552 = vmul.f32 %v549, %v551
        %v553 = vadd.f32 %v549, %v552
        %vm554 = vweird.f32 %v549
        %v555 = vsel %vm554, %v549, %v553
        %v556 = vmul.f32 %v545, %v555
        %v557 = vmul.f32 %v548, %v555
        %v558 = vsub.f32 %v541, %v556
        %v559 = vsub.f32 %v542, %v557
        %v560 = vmul.f32 %v558, %v558
        %v561 = vmul.f32 %v559, %v559
        %v562 = vsel %vm467, %v560, 0.0
        %563 = vadd.xlane.f32.xlu0 %v562
        %v564 = vpop.xlane.xlu0 %563
        %v565 = vsel %vm467, %v561, 0.0
        %566 = vadd.xlane.f32.xlu0 %v565
        %v567 = vpop.xlane.xlu0 %566
        %v568 = vmul.f32 %v564, %v555
        %v569 = vmul.f32 %v567, %v555
        %v570 = vadd.f32 %v568, 1e-05
        %v571 = vadd.f32 %v569, 1e-05
        %v572 = vrsqrt.pop %v570
        %v573 = vmul.f32 %v572, %v570
        %v574 = vmul.f32 %v573, %v572
        %v575 = vmul.f32 0.5, %v574
        %v576 = vsub.f32 1.5, %v575
        %v577 = vmul.f32 %v572, %v576
        %vm578 = vweird.f32 %v570
        %vm579 = vweird.f32 %v572
        %vm580 = vmor %vm578, %vm579
        %v581 = vsel %vm580, %v572, %v577
        %v582 = vrsqrt.pop %v571
        %v583 = vmul.f32 %v582, %v571
        %v584 = vmul.f32 %v583, %v582
        %v585 = vmul.f32 0.5, %v584
        %v586 = vsub.f32 1.5, %v585
        %v587 = vmul.f32 %v582, %v586
        %vm588 = vweird.f32 %v571
        %vm589 = vweird.f32 %v582
        %vm590 = vmor %vm588, %vm589
        %v591 = vsel %vm590, %v582, %v587
        %v592 = vmul.f32 %v558, %v581
        %v593 = vmul.f32 %v559, %v591
        %v594 = vld [vmem:[%s3] sm:$0x1]
        %v596 = vperm.slane %v594, 0
        %v598 = vmul.f32 %v592, %v596
        %v599 = vmul.f32 %v593, %v596
        %v600 = vld [vmem:[%s4] sm:$0x1]
        %v602 = vperm.slane %v600, 0
        %v604 = vadd.f32 %v598, %v602
        %v605 = vadd.f32 %v599, %v602
        %v606 = vmax.f32 %v604, 0.0
        %v607 = vmax.f32 %v605, 0.0
        %v608 = vld [vmem:[#allocation8] sm:$0xff]
        %v609 = vld [vmem:[#allocation8 + $0x8] sm:$0xff]
        %v610 = vld [vmem:[#allocation8 + $0x10] sm:$0xff]
        %v611 = vld [vmem:[#allocation8 + $0x18] sm:$0xff]
        %v613 = vsel %vm467, %v606, 0
        %v616 = vsel %vm467, %v607, 0
        %618 = vmatpush.msra.mxu0 0.0
        %619 = vmatpush.msra.mxu0 0.0
        %620 = vmatpush.msra.mxu0 0.0
        %621 = vmatpush.msra.mxu0 0.0
        %622 = vmatpush.msra.mxu0 0.0
        %623 = vmatpush.msra.mxu0 0.0
        %624 = vmatpush.msra.mxu0 0.0
        %625 = vmatpush.msra.mxu0 0.0
        %626 = vmatpush.msra.mxu0 0.0
        %627 = vmatpush.msra.mxu0 0.0
        %628 = vmatpush.msra.mxu0 0.0
        %629 = vmatpush.msra.mxu0 0.0
        %630 = vmatpush.msra.mxu0 %v611
        %631 = vmatpush.msra.mxu0 %v610
        %632 = vmatpush.msra.mxu0 %v609
        %633 = vmatpush.msra.mxu0 %v608
        %634 = vmatmul.f32.gmra.mxu0 %v613
        %v635 = vpop.f32.mrf.mxu0
        %v636 = vadd.f32 0.0, %v635
        %637 = vmatmul.f32.gmra.mxu0 %v616
        %v638 = vpop.f32.mrf.mxu0
        %v639 = vadd.f32 0.0, %v638
        %640 = vdwg.mxu0
        %v641 = vrot.slane %v636, 7
        %v642 = vrot.slane %v639, 7
        %v643 = vsel %vm499, %v641, %v642
        %v644 = vsel %vm499, %v642, %v641
        %v645 = vsel %vm504, %v644, 0.0
        %v646 = vsel %vm505, %v643, 0.0
        %649 = vrot.lane.b32.xlu0 %v636, 64
        %v650 = vpop.permute.xlu0 %649
        %651 = vrot.lane.b32.xlu0 %v639, 64
        %v652 = vpop.permute.xlu0 %651
        %v655 = vrot.slane %v650, 1
        %v656 = vrot.slane %v652, 1
        %v657 = vsel %vm518, %v655, %v656
        %v658 = vsel %vm518, %v656, %v655
        %v659 = vsel %vm523, %v657, 0.0
        %v660 = vsel %vm524, %v658, 0.0
        %661 = vrot.lane.b32.xlu0 %v636, 96
        %v662 = vpop.permute.xlu0 %661
        %663 = vrot.lane.b32.xlu0 %v639, 96
        %v664 = vpop.permute.xlu0 %663
        %v667 = vadd.f32 %v645, %v662
        %v668 = vadd.f32 %v646, %v664
        %v669 = vadd.f32 %v667, %v659
        %v670 = vadd.f32 %v668, %v660
        %v671 = vld [vmem:[%s6] sm:$0x1]
        %v673 = vperm.slane %v671, 0
        %v675 = vadd.f32 %v669, %v673
        %v676 = vadd.f32 %v670, %v673
        %v677 = vsel %vm467, %v675, 0.0
        %678 = vadd.xlane.f32.xlu0 %v677
        %v679 = vpop.xlane.xlu0 %678
        %v680 = vsel %vm467, %v676, 0.0
        %681 = vadd.xlane.f32.xlu0 %v680
        %v682 = vpop.xlane.xlu0 %681
        %v683 = vmul.f32 %v679, %v555
        %v684 = vmul.f32 %v682, %v555
        %v685 = vsub.f32 %v675, %v683
        %v686 = vsub.f32 %v676, %v684
        %v687 = vmul.f32 %v685, %v685
        %v688 = vmul.f32 %v686, %v686
        %v689 = vsel %vm467, %v687, 0.0
        %690 = vadd.xlane.f32.xlu0 %v689
        %v691 = vpop.xlane.xlu0 %690
        %v692 = vsel %vm467, %v688, 0.0
        %693 = vadd.xlane.f32.xlu0 %v692
        %v694 = vpop.xlane.xlu0 %693
        %v695 = vmul.f32 %v691, %v555
        %v696 = vmul.f32 %v694, %v555
        %v697 = vadd.f32 %v695, 1e-05
        %v698 = vadd.f32 %v696, 1e-05
        %v699 = vrsqrt.pop %v697
        %v700 = vmul.f32 %v699, %v697
        %v701 = vmul.f32 %v700, %v699
        %v702 = vmul.f32 0.5, %v701
        %v703 = vsub.f32 1.5, %v702
        %v704 = vmul.f32 %v699, %v703
        %vm705 = vweird.f32 %v697
        %vm706 = vweird.f32 %v699
        %vm707 = vmor %vm705, %vm706
        %v708 = vsel %vm707, %v699, %v704
        %v709 = vrsqrt.pop %v698
        %v710 = vmul.f32 %v709, %v698
        %v711 = vmul.f32 %v710, %v709
        %v712 = vmul.f32 0.5, %v711
        %v713 = vsub.f32 1.5, %v712
        %v714 = vmul.f32 %v709, %v713
        %vm715 = vweird.f32 %v698
        %vm716 = vweird.f32 %v709
        %vm717 = vmor %vm715, %vm716
        %v718 = vsel %vm717, %v709, %v714
        %v719 = vmul.f32 %v685, %v708
        %v720 = vmul.f32 %v686, %v718
        %v721 = vld [vmem:[%s7] sm:$0x1]
        %v723 = vperm.slane %v721, 0
        %v725 = vmul.f32 %v719, %v723
        %v726 = vmul.f32 %v720, %v723
        %v727 = vld [vmem:[%s8] sm:$0x1]
        %v729 = vperm.slane %v727, 0
        %v731 = vadd.f32 %v725, %v729
        %v732 = vadd.f32 %v726, %v729
        %v733 = vmax.f32 %v731, 0.0
        %v734 = vmax.f32 %v732, 0.0
        %v735 = vld [vmem:[%s9] sm:$0x1]
        %v736 = vld [vmem:[#allocation2] sm:$0x1]
        %738 = vset.pattern.permute.xlu0 0
        %739 = vperm.xlu0 %738, %v736
        %v740 = vpop.permute.xlu0 %739
        %v742 = vperm.slane %v740, 0
        %v744 = vsel %vm467, %v735, 0
        %v747 = vsel %vm467, %v733, 0
        %v750 = vsel %vm467, %v734, 0
        %752 = vmatpush.xpose.msra.mxu0 0.0
        %753 = vmatpush.xpose.msra.mxu0 0.0
        %754 = vmatpush.xpose.msra.mxu0 0.0
        %755 = vmatpush.xpose.msra.mxu0 0.0
        %756 = vmatpush.xpose.msra.mxu0 0.0
        %757 = vmatpush.xpose.msra.mxu0 0.0
        %758 = vmatpush.xpose.msra.mxu0 0.0
        %759 = vmatpush.xpose.msra.mxu0 0.0
        %760 = vmatpush.xpose.msra.mxu0 0.0
        %761 = vmatpush.xpose.msra.mxu0 0.0
        %762 = vmatpush.xpose.msra.mxu0 0.0
        %763 = vmatpush.xpose.msra.mxu0 0.0
        %764 = vmatpush.xpose.msra.mxu0 0.0
        %765 = vmatpush.xpose.msra.mxu0 0.0
        %766 = vmatpush.xpose.msra.mxu0 %v750
        %767 = vmatpush.xpose.msra.mxu0 %v747
        %768 = vmatmul.f32.gmra.mxu0 %v744
        %v769 = vpop.f32.mrf.mxu0
        %v770 = vadd.f32 %v742, %v769
        %771 = vdwg.mxu0
        %v772 = vmul.f32 %v770, 1.9459101
        %v773 = vmul.f32 %v772, 1.442695
        %v774 = vpow.pop %v773
        %v775 = vsub.f32 %v774, 1.0
        %v776 = vadd.f32 %v775, 0.5
        %v777 = vcvt.f32.s32.to.zero.pseudo %v776
        %vm778 = vcmask 122880
        %779 = vst.msk [vmem:[%s440] sm:$0x1] %vm778, %v777
        %s780 = sand.u32 %s275, 1
        %s781 = scalar_lea.sflag [#allocation5], %s780
        %s782 = sand.u32 %s275, 1
        %s783 = scalar_lea.vmem [#allocation9], %s782
        // Predicated region
        $region77: #{tpu_custom_call.1} parent=63 // pred_check
          %p784 = pneg %p285
        $region78: #{tpu_custom_call.1} parent=63 // pred_check_branch
          %786 = sbr.rel (%p784) target = $region80
        $region79: #{tpu_custom_call.1} parent=63 // pred_region
          %788 = vsyncadd %s781, 0
          %s789 = scalar_lea.hbm %s11, %s31
          %s791 = sshll.u32 %s783, 4
          %s792 = int_to_ptr.vmem [resolvable:$true] %s791
          %s793 = sshll.u32 %s789, 4
          %s794 = int_to_ptr.hbm [resolvable:$true] %s793
          %796 = dma.vmem_to_hbm [thread:$0]  %s792, 16, %s794, %s781
        $region80: #{tpu_custom_call.1} parent=63 // pred_fallthru
          _
      $region64: #{tpu_custom_call.1} parent=5 // pred_fallthru
        _
      %p797 = scmp.le.s32.totalorder 2, %s26
      // Predicated region
      $region81: #{tpu_custom_call.1} parent=5 // pred_check
        %p798 = pneg %p797
      $region82: #{tpu_custom_call.1} parent=5 // pred_check_branch
        %800 = sbr.rel (%p798) target = $region84
      $region83: #{tpu_custom_call.1} parent=5 // pred_region
        %s801 = ssub.s32 %s26, 2
        // Predicated region
        $region85: #{tpu_custom_call.1} parent=83 // pred_check
          %p802 = pneg %p291
        $region86: #{tpu_custom_call.1} parent=83 // pred_check_branch
          %804 = sbr.rel (%p802) target = $region88
        $region87: #{tpu_custom_call.1} parent=83 // pred_region
          %s805 = sand.u32 %s276, 1
          %s806 = scalar_lea.sflag [#allocation5], %s805
          %s807 = sand.u32 %s276, 1
          %s808 = scalar_lea.vmem [#allocation9], %s807
          %810 = dma.done %s806, 16
        $region88: #{tpu_custom_call.1} parent=83 // pred_fallthru
          _
      $region84: #{tpu_custom_call.1} parent=5 // pred_fallthru
        _
    $region6: #{tpu_custom_call.1} parent=1 // loop_footer
      %s30 = sadd.s32 1, %s26
    $region7: #{tpu_custom_call.1} parent=1 // loop_footer_branch
      %25 = sbr.rel target = $region3
    $region8: #{tpu_custom_call.1} parent=1 // loop_exit
      _
    %811 = vsyncpa [#allocation4], 1
    %s812 = scalar_lea.sflag [#allocation4], 1
    %813 = vsyncpa %s812, 1
    %814 = vsyncpa [#allocation7], 1
    %815 = vsyncpa [#allocation5], 1
    %s816 = scalar_lea.sflag [#allocation5], 1
    %817 = vsyncpa %s816, 1

</llo_original>
